<compile_context>
chip_gen: v5e
topology: v5e:2x2
jax: 0.10.0
libtpu: 0.0.40
codegen_flags: <defaults>
</compile_context>

<pallas_src>
import jax
import jax.numpy as jnp
from jax.experimental import pallas as pl
from jax.experimental.pallas import tpu as pltpu


def _onedim_conv_kernel(x_ref, w_ref, o_ref):
    # x_ref : (S, TN, Fp)  packed feats for this (hop, node-tile)
    # w_ref : (S, Fp)      per-hop weight, pre-scaled by 1/S, lane-tiled
    # o_ref : (TN, Fp)     sum_s x[s] * w[s]   (== mean over subgraphs)
    S = x_ref.shape[0]
    w = w_ref[...].astype(jnp.float32)                       # tiny (S, Fp)
    # Running accumulation over the subgraph axis (static unroll; S is small).
    # Only one (TN, Fp) input slice plus the f32 accumulator is live at once.
    acc = x_ref[0].astype(jnp.float32) * w[0:1, :]
    for s in range(1, S):
        acc = acc + x_ref[s].astype(jnp.float32) * w[s:s + 1, :]
    o_ref[...] = acc.astype(o_ref.dtype)


def onedim_convolution(feats, weights, *, vmem_budget_bytes=16 * 1024 * 1024):
    """feats:   [H, S, N, F]  (hop, subgraph, node, feat)  f32 or bf16
       weights: [H, F, S]     (same layout as the PyTorch ParameterList)
       returns: [H, N, F] stacked result; hop i == aggregated_feat_list[i]."""
    H, S, N, F = feats.shape
    out_dtype = feats.dtype
    in_itemsize = jnp.dtype(feats.dtype).itemsize
    out_itemsize = jnp.dtype(out_dtype).itemsize

    # Fold the mean's 1/S into the weight (only H*S*F scalars) and put the
    # subgraph axis first: [H, S, F].
    w_t = jnp.transpose(weights, (0, 2, 1)).astype(jnp.float32) / float(S)

    # Lane-dense packing factor: fold `pack` node rows into the lane axis.
    pack = 128 // F if (F < 128 and 128 % F == 0) else 1
    Fp = F * pack

    # Choose the node tile TN from a generation-safe VMEM budget:
    #   2 (double buffer) * (S*TN*Fp input + TN*Fp output) bytes per tile row.
    per_row = 2 * (S * Fp * in_itemsize + Fp * out_itemsize)
    tn_cap = max(16, (vmem_budget_bytes // per_row) // 16 * 16)
    tn_cap = min(tn_cap, 1024)

    n_packed_raw = -(-N // pack)           # packed node rows before tiling
    if n_packed_raw <= tn_cap:
        TN = n_packed_raw                  # block == full dim (no 8x rule)
        Np = n_packed_raw
    else:
        TN = tn_cap                        # multiple of 16 -> sublane-legal
        Np = -(-n_packed_raw // TN) * TN
    N_total = Np * pack

    pad = N_total - N
    if pad:
        feats = jnp.pad(feats, ((0, 0), (0, 0), (0, pad), (0, 0)))

    # [H, S, Np, pack, F] -> [H, S, Np, Fp]: node row p*pack+k lands in
    # packed row p, lanes [k*F:(k+1)*F].
    feats_p = feats.reshape(H, S, Np, pack, F).reshape(H, S, Np, Fp)
    # Tile (not broadcast) the weight so every lane block sees the same F
    # weights, matching the packing above.
    w_p = jnp.tile(w_t, (1, 1, pack))      # [H, S, Fp]

    n_tiles = Np // TN
    grid = (H, n_tiles)

    cost = pl.CostEstimate(
        flops=2 * H * S * N * F,
        transcendentals=0,
        bytes_accessed=(H * S * N * F) * in_itemsize
        + (H * N * F) * out_itemsize
        + H * S * Fp * 4,
    )

    out_p = pl.pallas_call(
        _onedim_conv_kernel,
        out_shape=jax.ShapeDtypeStruct((H, Np, Fp), out_dtype),
        grid=grid,
        in_specs=[
            pl.BlockSpec((None, S, TN, Fp), lambda h, n: (h, 0, n, 0)),
            pl.BlockSpec((None, S, Fp), lambda h, n: (h, 0, 0)),
        ],
        out_specs=pl.BlockSpec((None, TN, Fp), lambda h, n: (h, n, 0)),
        compiler_params=pltpu.CompilerParams(
            dimension_semantics=("parallel", "parallel"),
            vmem_limit_bytes=32 * 1024 * 1024,
        ),
        cost_estimate=cost,
    )(feats_p, w_p)

    # Unpack lanes back to node rows and drop any padding.
    out = out_p.reshape(H, Np, pack, F).reshape(H, N_total, F)[:, :N, :]
    return out


def reference(feats, weights):
    # Pure-JAX mirror of the PyTorch forward (stack on dim=2, mean on dim=2).
    H = feats.shape[0]
    outs = []
    for i in range(H):
        adopted = jnp.transpose(feats[i], (1, 2, 0))              # [N, F, S]
        inter = (adopted * weights[i][None, :, :]).mean(axis=2)   # [N, F]
        outs.append(inter)
    return outs


def xavier_uniform(key, shape):
    fan_in, fan_out = shape[0], shape[1]
    limit = (6.0 / (fan_in + fan_out)) ** 0.5
    return jax.random.uniform(key, shape, jnp.float32, -limit, limit)


if __name__ == "__main__":
    # Small shapes consistent with the module.
    prop_steps = 3      # H (hops)
    num_subgraphs = 4   # S
    feat_dim = 32       # F
    num_nodes = 16      # N

    key = jax.random.PRNGKey(0)
    k_feat, k_w = jax.random.split(key)

    # feat_list_list[i][s] is an [N, F] feature matrix; represent the whole
    # nested list as one dense array [H, S, N, F].
    feats = jax.random.normal(
        k_feat, (prop_steps, num_subgraphs, num_nodes, feat_dim), jnp.float32)

    # Deterministic xavier-uniform init of the per-hop weights [F, S].
    w_keys = jax.random.split(k_w, prop_steps)
    weights = jnp.stack(
        [xavier_uniform(w_keys[i], (feat_dim, num_subgraphs))
         for i in range(prop_steps)], axis=0)                  # [H, F, S]

    fn = jax.jit(onedim_convolution)
    out = jax.block_until_ready(fn(feats, weights))            # [H, N, F]

    refs = reference(feats, weights)
    for i in range(prop_steps):
        assert out[i].shape == (num_nodes, feat_dim)
        assert jnp.allclose(out[i], refs[i], atol=1e-5, rtol=1e-5)

    print("KERNEL_OK")
</pallas_src>

<mosaic_0001>
module attributes {stable_mosaic.version = 11 : i64} {
  func.func @_onedim_conv_kernel(%arg0: i32, %arg1: i32, %arg2: memref<1x4x4x128xf32, #tpu.memory_space<vmem>>, %arg3: memref<1x4x128xf32, #tpu.memory_space<vmem>>, %arg4: memref<1x4x128xf32, #tpu.memory_space<vmem>>) attributes {dimension_semantics = [#tpu.dimension_semantics<parallel>, #tpu.dimension_semantics<parallel>], iteration_bounds = array<i64: 3, 1>, scalar_prefetch = 0 : i64, scratch_operands = 0 : i64, tpu.core_type = #tpu.core_type<tc>, window_params = [{transform_indices = @transform_0, window_bounds = array<i64: 1, 4, 4, 128>}, {transform_indices = @transform_1, window_bounds = array<i64: 1, 4, 128>}, {transform_indices = @transform_2, window_bounds = array<i64: 1, 4, 128>}]} {
    %c0 = arith.constant 0 : index
    %c0_0 = arith.constant 0 : index
    %c0_1 = arith.constant 0 : index
    %0 = vector.load %arg3[%c0, %c0_0, %c0_1] : memref<1x4x128xf32, #tpu.memory_space<vmem>>, vector<1x4x128xf32>
    %1 = vector.shape_cast %0 : vector<1x4x128xf32> to vector<4x128xf32>
    %c0_2 = arith.constant 0 : index
    %c0_3 = arith.constant 0 : index
    %c0_4 = arith.constant 0 : index
    %c0_5 = arith.constant 0 : index
    %2 = vector.load %arg2[%c0_2, %c0_3, %c0_4, %c0_5] : memref<1x4x4x128xf32, #tpu.memory_space<vmem>>, vector<1x1x4x128xf32>
    %3 = vector.shape_cast %2 : vector<1x1x4x128xf32> to vector<4x128xf32>
    %4 = vector.extract_strided_slice %1 {offsets = [0, 0], sizes = [1, 128], strides = [1, 1]} : vector<4x128xf32> to vector<1x128xf32>
    %5 = vector.broadcast %4 : vector<1x128xf32> to vector<4x128xf32>
    %6 = arith.mulf %3, %5 : vector<4x128xf32>
    %c0_6 = arith.constant 0 : index
    %c1 = arith.constant 1 : index
    %c0_7 = arith.constant 0 : index
    %c0_8 = arith.constant 0 : index
    %7 = vector.load %arg2[%c0_6, %c1, %c0_7, %c0_8] : memref<1x4x4x128xf32, #tpu.memory_space<vmem>>, vector<1x1x4x128xf32>
    %8 = vector.shape_cast %7 : vector<1x1x4x128xf32> to vector<4x128xf32>
    %9 = vector.extract_strided_slice %1 {offsets = [1, 0], sizes = [1, 128], strides = [1, 1]} : vector<4x128xf32> to vector<1x128xf32>
    %10 = vector.broadcast %9 : vector<1x128xf32> to vector<4x128xf32>
    %11 = arith.mulf %8, %10 : vector<4x128xf32>
    %12 = arith.addf %6, %11 : vector<4x128xf32>
    %c0_9 = arith.constant 0 : index
    %c2 = arith.constant 2 : index
    %c0_10 = arith.constant 0 : index
    %c0_11 = arith.constant 0 : index
    %13 = vector.load %arg2[%c0_9, %c2, %c0_10, %c0_11] : memref<1x4x4x128xf32, #tpu.memory_space<vmem>>, vector<1x1x4x128xf32>
    %14 = vector.shape_cast %13 : vector<1x1x4x128xf32> to vector<4x128xf32>
    %15 = vector.extract_strided_slice %1 {offsets = [2, 0], sizes = [1, 128], strides = [1, 1]} : vector<4x128xf32> to vector<1x128xf32>
    %16 = vector.broadcast %15 : vector<1x128xf32> to vector<4x128xf32>
    %17 = arith.mulf %14, %16 : vector<4x128xf32>
    %18 = arith.addf %12, %17 : vector<4x128xf32>
    %c0_12 = arith.constant 0 : index
    %c3 = arith.constant 3 : index
    %c0_13 = arith.constant 0 : index
    %c0_14 = arith.constant 0 : index
    %19 = vector.load %arg2[%c0_12, %c3, %c0_13, %c0_14] : memref<1x4x4x128xf32, #tpu.memory_space<vmem>>, vector<1x1x4x128xf32>
    %20 = vector.shape_cast %19 : vector<1x1x4x128xf32> to vector<4x128xf32>
    %21 = vector.extract_strided_slice %1 {offsets = [3, 0], sizes = [1, 128], strides = [1, 1]} : vector<4x128xf32> to vector<1x128xf32>
    %22 = vector.broadcast %21 : vector<1x128xf32> to vector<4x128xf32>
    %23 = arith.mulf %20, %22 : vector<4x128xf32>
    %24 = arith.addf %18, %23 : vector<4x128xf32>
    %c0_15 = arith.constant 0 : index
    %c0_16 = arith.constant 0 : index
    %c0_17 = arith.constant 0 : index
    %25 = vector.load %arg4[%c0_15, %c0_16, %c0_17] : memref<1x4x128xf32, #tpu.memory_space<vmem>>, vector<1x4x128xf32>
    %26 = vector.shape_cast %25 : vector<1x4x128xf32> to vector<4x128xf32>
    %27 = vector.shape_cast %24 : vector<4x128xf32> to vector<1x4x128xf32>
    tpu.vector_store %arg4[%c0_15, %c0_16, %c0_17], %27 {strides = array<i32>} : memref<1x4x128xf32, #tpu.memory_space<vmem>>, vector<1x4x128xf32>,
    return
  }
  func.func @transform_0(%arg0: i32, %arg1: i32) -> (i32, i32, i32, i32) {
    %c0_i32 = arith.constant 0 : i32
    %c0_i32_0 = arith.constant 0 : i32
    %c0_i32_1 = arith.constant 0 : i32
    return %arg0, %c0_i32, %arg1, %c0_i32_0 : i32, i32, i32, i32
  }
  func.func @transform_1(%arg0: i32, %arg1: i32) -> (i32, i32, i32) {
    %c0_i32 = arith.constant 0 : i32
    %c0_i32_0 = arith.constant 0 : i32
    %c0_i32_1 = arith.constant 0 : i32
    return %arg0, %c0_i32, %c0_i32_0 : i32, i32, i32
  }
  func.func @transform_2(%arg0: i32, %arg1: i32) -> (i32, i32, i32) {
    %c0_i32 = arith.constant 0 : i32
    %c0_i32_0 = arith.constant 0 : i32
    return %arg0, %arg1, %c0_i32 : i32, i32, i32
  }
}

</mosaic_0001>

<llo_original>
// kernel: tile.9
$region0: #{tile.9}
  %s0 = inlined_call_operand.vmem [shape: f32[3,4,4,32], index: 0, kind: input, shape index: {}]
  %s1 = inlined_call_operand.vmem [shape: f32[3,4,128], index: 1, kind: output, shape index: {}]
  $region1: #{tile.9} parent=0
    #allocation0 [shape = 'u8[12288]{0}', space=vmem, size = 0x3000, scoped, tag = 'scoped mem for output reshape']
    #allocation1 [shape = 'u8[49152]{0}', space=vmem, size = 0xc000, scoped, tag = 'scoped mem for input reshape']
    %s3 = ssub.s32 16, 1
    %s4 = scalar_lea.vmem %s0, 44
    %v5 = vld [vmem:[%s4] sm:%s3]
    %s6 = scalar_lea.vmem [#allocation1], 88
    %7 = vst [vmem:[%s6] sm:%s3] %v5
    %s8 = scalar_lea.vmem %s0, 40
    %v9 = vld [vmem:[%s8] sm:%s3]
    %s10 = scalar_lea.vmem [#allocation1], 80
    %11 = vst [vmem:[%s10] sm:%s3] %v9
    %s12 = scalar_lea.vmem %s0, 36
    %v13 = vld [vmem:[%s12] sm:%s3]
    %s14 = scalar_lea.vmem [#allocation1], 72
    %15 = vst [vmem:[%s14] sm:%s3] %v13
    %s16 = scalar_lea.vmem %s0, 32
    %v17 = vld [vmem:[%s16] sm:%s3]
    %s18 = scalar_lea.vmem [#allocation1], 64
    %19 = vst [vmem:[%s18] sm:%s3] %v17
    %s20 = scalar_lea.vmem %s0, 28
    %v21 = vld [vmem:[%s20] sm:%s3]
    %s22 = scalar_lea.vmem [#allocation1], 56
    %23 = vst [vmem:[%s22] sm:%s3] %v21
    %s24 = scalar_lea.vmem %s0, 24
    %v25 = vld [vmem:[%s24] sm:%s3]
    %s26 = scalar_lea.vmem [#allocation1], 48
    %27 = vst [vmem:[%s26] sm:%s3] %v25
    %s28 = scalar_lea.vmem %s0, 20
    %v29 = vld [vmem:[%s28] sm:%s3]
    %s30 = scalar_lea.vmem [#allocation1], 40
    %31 = vst [vmem:[%s30] sm:%s3] %v29
    %s32 = scalar_lea.vmem %s0, 16
    %v33 = vld [vmem:[%s32] sm:%s3]
    %s34 = scalar_lea.vmem [#allocation1], 32
    %35 = vst [vmem:[%s34] sm:%s3] %v33
    %s36 = scalar_lea.vmem %s0, 12
    %v37 = vld [vmem:[%s36] sm:%s3]
    %s38 = scalar_lea.vmem [#allocation1], 24
    %39 = vst [vmem:[%s38] sm:%s3] %v37
    %s40 = scalar_lea.vmem %s0, 8
    %v41 = vld [vmem:[%s40] sm:%s3]
    %s42 = scalar_lea.vmem [#allocation1], 16
    %43 = vst [vmem:[%s42] sm:%s3] %v41
    %s44 = scalar_lea.vmem %s0, 4
    %v45 = vld [vmem:[%s44] sm:%s3]
    %s46 = scalar_lea.vmem [#allocation1], 8
    %47 = vst [vmem:[%s46] sm:%s3] %v45
    %v48 = vld [vmem:[%s0] sm:%s3]
    %49 = vst [vmem:[#allocation1] sm:%s3] %v48
    %v50 = vld [vmem:[#allocation1] ss:$8 sm:$0xf]
    %v51 = vld [vmem:[#allocation1] ss:$8 sm:$0xf0]
    %vm52 = vcmask 1047556
    %v53 = vsel %vm52, %v51, %v50
    %vm54 = vcmask 261120
    %55 = vst.msk [vmem:[#allocation0] sm:$0xf] %vm54, %v53
    %s56 = scalar_lea.vmem [#allocation0], 4
    %57 = vst.msk [vmem:[%s56] sm:$0xf0] %vm54, %v53
    %s58 = scalar_lea.vmem [#allocation1], 64
    %v59 = vld [vmem:[%s58] ss:$8 sm:$0xf]
    %vm60 = vcmask 261120
    %s61 = scalar_lea.vmem [#allocation0], 16
    %62 = vst.msk [vmem:[%s61] sm:$0xf] %vm60, %v59
    %s63 = scalar_lea.vmem [#allocation1], 3
    %v64 = vld [vmem:[%s63] ss:$8 sm:$0xf]
    %s65 = scalar_lea.vmem [#allocation1], 3
    %v66 = vld [vmem:[%s65] ss:$8 sm:$0xf0]
    %vm67 = vcmask 1047556
    %v68 = vsel %vm67, %v66, %v64
    %69 = vrot.lane.b32.xlu0 %v68, 96
    %v70 = vpop.permute.xlu0 %69
    %vm71 = vcmask 1048320
    %72 = vst.msk [vmem:[#allocation0] sm:$0xf] %vm71, %v70
    %s73 = scalar_lea.vmem [#allocation0], 4
    %74 = vst.msk [vmem:[%s73] sm:$0xf0] %vm71, %v70
    %s75 = scalar_lea.vmem [#allocation1], 67
    %v76 = vld [vmem:[%s75] ss:$8 sm:$0xf]
    %77 = vrot.lane.b32.xlu0 %v76, 96
    %v78 = vpop.permute.xlu0 %77
    %vm79 = vcmask 1048320
    %s80 = scalar_lea.vmem [#allocation0], 16
    %81 = vst.msk [vmem:[%s80] sm:$0xf] %vm79, %v78
    %s82 = scalar_lea.vmem [#allocation1], 2
    %v83 = vld [vmem:[%s82] ss:$8 sm:$0xf]
    %s84 = scalar_lea.vmem [#allocation1], 2
    %v85 = vld [vmem:[%s84] ss:$8 sm:$0xf0]
    %vm86 = vcmask 1047556
    %v87 = vsel %vm86, %v85, %v83
    %88 = vrot.lane.b32.xlu0 %v87, 64
    %v89 = vpop.permute.xlu0 %88
    %vm90 = vcmask 785920
    %91 = vst.msk [vmem:[#allocation0] sm:$0xf] %vm90, %v89
    %s92 = scalar_lea.vmem [#allocation0], 4
    %93 = vst.msk [vmem:[%s92] sm:$0xf0] %vm90, %v89
    %s94 = scalar_lea.vmem [#allocation1], 66
    %v95 = vld [vmem:[%s94] ss:$8 sm:$0xf]
    %96 = vrot.lane.b32.xlu0 %v95, 64
    %v97 = vpop.permute.xlu0 %96
    %vm98 = vcmask 785920
    %s99 = scalar_lea.vmem [#allocation0], 16
    %100 = vst.msk [vmem:[%s99] sm:$0xf] %vm98, %v97
    %s101 = scalar_lea.vmem [#allocation1], 1
    %v102 = vld [vmem:[%s101] ss:$8 sm:$0xf]
    %s103 = scalar_lea.vmem [#allocation1], 1
    %v104 = vld [vmem:[%s103] ss:$8 sm:$0xf0]
    %vm105 = vcmask 1047556
    %v106 = vsel %vm105, %v104, %v102
    %107 = vrot.lane.b32.xlu0 %v106, 32
    %v108 = vpop.permute.xlu0 %107
    %vm109 = vcmask 523520
    %110 = vst.msk [vmem:[#allocation0] sm:$0xf] %vm109, %v108
    %s111 = scalar_lea.vmem [#allocation0], 4
    %112 = vst.msk [vmem:[%s111] sm:$0xf0] %vm109, %v108
    %s113 = scalar_lea.vmem [#allocation1], 65
    %v114 = vld [vmem:[%s113] ss:$8 sm:$0xf]
    %115 = vrot.lane.b32.xlu0 %v114, 32
    %v116 = vpop.permute.xlu0 %115
    %vm117 = vcmask 523520
    %s118 = scalar_lea.vmem [#allocation0], 16
    %119 = vst.msk [vmem:[%s118] sm:$0xf] %vm117, %v116
    %s121 = ssub.s32 16, 1
    %v122 = vld [vmem:[#allocation0] sm:%s121]
    %s124 = ssub.s32 16, 1
    %125 = vst [vmem:[%s1] sm:%s124] %v122
    %s126 = scalar_lea.vmem [#allocation0], 8
    %v127 = vld [vmem:[%s126] sm:%s121]
    %s129 = ssub.s32 16, 1
    %s130 = scalar_lea.vmem %s1, 4
    %131 = vst [vmem:[%s130] sm:%s129] %v127
    %s132 = scalar_lea.vmem [#allocation0], 16
    %v133 = vld [vmem:[%s132] sm:%s121]
    %s135 = ssub.s32 16, 1
    %s136 = scalar_lea.vmem %s1, 8
    %137 = vst [vmem:[%s136] sm:%s135] %v133

// kernel: onedim_convolution.1
$region0: #{onedim_convolution.1}
  #allocation0 [shape = 'u32[]', space=smem, size = 0x4, offset = 0x4, fixed_abs, tag = 'smem constant byte address 0x4 - core index']
  #allocation1 [shape = 'u32[72,128]{1,0:T(1,128)}', space=vmem, size = 0x9000, scoped, tag = 'internal scratch']
  %s0 = inlined_call_operand.vmem [shape: f32[3,4,4,128], index: 0, kind: input, shape index: {}]
  %s1 = inlined_call_operand.vmem [shape: f32[3,4,128], index: 1, kind: input, shape index: {}]
  %s2 = inlined_call_operand.vmem [shape: f32[3,4,128], index: 2, kind: output, shape index: {}]
  %s3 = sld [smem:[#allocation0]]
  $region41: #{onedim_convolution.1} parent=0
    _
  %s5 = ssub.s32 1, %s3
  %s6 = scalar_select 0, %s5, %s3
  loop: start=0, step=1, limit=5
  $region2: #{onedim_convolution.1} parent=0 // loop_pre_header
    _
  $region3: #{onedim_convolution.1} parent=0 // loop_header
    %s8 = sphi 0, %s12
    %p9 = scmp.ge.s32.totalorder %s8, 5
    %s15 = sphi 0, %s27
    %s16 = sphi 0, %s23
    %s17 = sphi 0, %s15
    %s18 = sphi 0, %s16
    %s19 = sphi 0, %s17
    %s20 = sphi 0, %s18
    %s32 = sphi 0, %s34
    %s35 = sphi 0, %s32
    %s36 = sphi 0, %s35
    %s52 = sphi 0, %s36
    %s58 = sphi 0, %s60
    %s61 = sphi 0, %s58
    %s62 = sphi 0, %s61
    %s78 = sphi 0, %s62
    %s86 = sphi 0, %s88
    %s89 = sphi 0, %s86
    %s90 = sphi 0, %s89
    %s106 = sphi 0, %s90
  $region4: #{onedim_convolution.1} parent=0 // loop_header_branch
    %11 = sbr.rel (%p9) target = $region8
  $region5: #{onedim_convolution.1} parent=0 // loop_body
    %s13 = ssub.s32 %s8, 1
    %s14 = ssub.s32 %s8, 2
    %s21 = sadd.s32 1, %s16
    %p22 = scmp.ge.s32.totalorder %s21, 1
    %s23 = scalar_select %p22, 0, %s21
    %s24 = sadd.s32 1, %s15
    %s25 = scalar_select %p22, %s24, %s15
    %p26 = scmp.ge.s32.totalorder %s25, 3
    %s27 = scalar_select %p26, 0, %s25
    %s28 = ssub.s32 %s15, %s27
    %s29 = ssub.s32 %s16, %s23
    %s30 = sor.u32 %s28, %s29
    %p31 = scmp.eq.s32.totalorder %s30, 0
    %s33 = sadd.s32 %s32, 1
    %s34 = scalar_select %p31, %s32, %s33
    %p37 = pneg %p31
    %p38 = scmp.eq.s32.totalorder %s8, 2
    %p39 = por %p37, %p38
    %p40 = scmp.ne.s32.totalorder %s32, %s35
    %p41 = scmp.eq.s32.totalorder %s8, 0
    %p42 = por %p40, %p41
    %p43 = scmp.ne.s32.totalorder %s32, %s35
    %p44 = scmp.eq.s32.totalorder %s13, 2
    %p45 = por %p43, %p44
    %p46 = scmp.ne.s32.totalorder %s35, %s36
    %p47 = scmp.eq.s32.totalorder %s13, 0
    %p48 = por %p46, %p47
    %p49 = scmp.ne.s32.totalorder %s35, %s36
    %p50 = scmp.eq.s32.totalorder %s14, 2
    %p51 = por %p49, %p50
    %p53 = scmp.ne.s32.totalorder %s36, %s52
    %p54 = scmp.eq.s32.totalorder %s14, 0
    %p55 = por %p53, %p54
    %s56 = ssub.s32 %s15, %s27
    %p57 = scmp.eq.s32.totalorder %s56, 0
    %s59 = sadd.s32 %s58, 1
    %s60 = scalar_select %p57, %s58, %s59
    %p63 = pneg %p57
    %p64 = scmp.eq.s32.totalorder %s8, 2
    %p65 = por %p63, %p64
    %p66 = scmp.ne.s32.totalorder %s58, %s61
    %p67 = scmp.eq.s32.totalorder %s8, 0
    %p68 = por %p66, %p67
    %p69 = scmp.ne.s32.totalorder %s58, %s61
    %p70 = scmp.eq.s32.totalorder %s13, 2
    %p71 = por %p69, %p70
    %p72 = scmp.ne.s32.totalorder %s61, %s62
    %p73 = scmp.eq.s32.totalorder %s13, 0
    %p74 = por %p72, %p73
    %p75 = scmp.ne.s32.totalorder %s61, %s62
    %p76 = scmp.eq.s32.totalorder %s14, 2
    %p77 = por %p75, %p76
    %p79 = scmp.ne.s32.totalorder %s62, %s78
    %p80 = scmp.eq.s32.totalorder %s14, 0
    %p81 = por %p79, %p80
    %s82 = ssub.s32 %s15, %s27
    %s83 = ssub.s32 %s16, %s23
    %s84 = sor.u32 %s82, %s83
    %p85 = scmp.eq.s32.totalorder %s84, 0
    %s87 = sadd.s32 %s86, 1
    %s88 = scalar_select %p85, %s86, %s87
    %p91 = pneg %p85
    %p92 = scmp.eq.s32.totalorder %s8, 2
    %p93 = por %p91, %p92
    %p94 = scmp.ne.s32.totalorder %s86, %s89
    %p95 = scmp.eq.s32.totalorder %s8, 0
    %p96 = por %p94, %p95
    %p97 = scmp.ne.s32.totalorder %s86, %s89
    %p98 = scmp.eq.s32.totalorder %s13, 2
    %p99 = por %p97, %p98
    %p100 = scmp.ne.s32.totalorder %s89, %s90
    %p101 = scmp.eq.s32.totalorder %s13, 0
    %p102 = por %p100, %p101
    %p103 = scmp.ne.s32.totalorder %s89, %s90
    %p104 = scmp.eq.s32.totalorder %s14, 2
    %p105 = por %p103, %p104
    %p107 = scmp.ne.s32.totalorder %s90, %s106
    %p108 = scmp.eq.s32.totalorder %s14, 0
    %p109 = por %p107, %p108
    %p110 = scmp.le.s32.totalorder 1, %s8
    %p111 = scmp.lt.s32.totalorder %s8, 4
    %p112 = pnand %p110, %p111
    %p113 = pneg %p112
    // Predicated region
    $region9: #{onedim_convolution.1} parent=5 // pred_check
      _
    $region10: #{onedim_convolution.1} parent=5 // pred_check_branch
      %115 = sbr.rel (%p112) target = $region12
    $region11: #{onedim_convolution.1} parent=5 // pred_region
      %s116 = ssub.s32 %s8, 1
    $region12: #{onedim_convolution.1} parent=5 // pred_fallthru
      _
    %p117 = scmp.lt.s32.totalorder %s8, 3
    // Predicated region
    $region13: #{onedim_convolution.1} parent=5 // pred_check
      %p118 = pneg %p117
    $region14: #{onedim_convolution.1} parent=5 // pred_check_branch
      %120 = sbr.rel (%p118) target = $region16
    $region15: #{onedim_convolution.1} parent=5 // pred_region
      // Predicated region
      $region17: #{onedim_convolution.1} parent=15 // pred_check
        %p121 = pneg %p42
      $region18: #{onedim_convolution.1} parent=15 // pred_check_branch
        %123 = sbr.rel (%p121) target = $region20
      $region19: #{onedim_convolution.1} parent=15 // pred_region
        %p124 = scmp.lt.s32.totalorder %s15, 2
        %s125 = scalar_select %p124, %s15, 2
        %p126 = scmp.lt.s32.totalorder %s16, 0
        %s127 = scalar_select %p126, %s16, 0
        %s128 = smul.addr %s125, 4
        %s129 = sadd.s32 %s127, %s128
        %s130 = smul.addr %s129, 4
        %s131 = scalar_lea.vmem %s0, %s130
      $region20: #{onedim_convolution.1} parent=15 // pred_fallthru
        _
      // Predicated region
      $region21: #{onedim_convolution.1} parent=15 // pred_check
        %p132 = pneg %p68
      $region22: #{onedim_convolution.1} parent=15 // pred_check_branch
        %134 = sbr.rel (%p132) target = $region24
      $region23: #{onedim_convolution.1} parent=15 // pred_region
        %p135 = scmp.lt.s32.totalorder %s15, 2
        %s136 = scalar_select %p135, %s15, 2
        %s137 = smul.addr %s136, 4
        %s138 = scalar_lea.vmem %s1, %s137
      $region24: #{onedim_convolution.1} parent=15 // pred_fallthru
        _
    $region16: #{onedim_convolution.1} parent=5 // pred_fallthru
      _
    %p139 = scmp.le.s32.totalorder 1, %s8
    %p140 = scmp.lt.s32.totalorder %s8, 4
    %p141 = pnand %p139, %p140
    %p142 = pneg %p141
    // Predicated region
    $region25: #{onedim_convolution.1} parent=5 // pred_check
      _
    $region26: #{onedim_convolution.1} parent=5 // pred_check_branch
      %144 = sbr.rel (%p141) target = $region28
    $region27: #{onedim_convolution.1} parent=5 // pred_region
      %s145 = ssub.s32 %s8, 1
      %p146 = scmp.lt.s32.totalorder %s17, 2
      %s147 = scalar_select %p146, %s17, 2
      %p148 = scmp.lt.s32.totalorder %s18, 0
      %s149 = scalar_select %p148, %s18, 0
      %s150 = smul.addr %s147, 4
      %s151 = sadd.s32 %s149, %s150
      %s152 = smul.addr %s151, 4
      %s153 = scalar_lea.vmem %s0, %s152
      %p154 = pneg %p48
      %p155 = pneg %p45
      %p156 = scmp.lt.s32.totalorder %s17, 2
      %s157 = scalar_select %p156, %s17, 2
      %s158 = smul.addr %s157, 4
      %s159 = scalar_lea.vmem %s1, %s158
      %p160 = pneg %p74
      %p161 = pneg %p71
      %p162 = pneg %p102
      %p163 = pneg %p99
      %p164 = scmp.lt.s32.totalorder %s17, 2
      %s165 = scalar_select %p164, %s17, 2
      %p166 = scmp.lt.s32.totalorder %s18, 0
      %s167 = scalar_select %p166, %s18, 0
      %s168 = sadd.s32 %s167, %s165
      %s169 = smul.addr %s168, 4
      %s170 = scalar_lea.vmem %s2, %s169
      %p171 = scmp.lt.s32.totalorder %s17, 2
      %s172 = scalar_select %p171, %s17, 2
      %p173 = scmp.lt.s32.totalorder %s18, 0
      %s174 = scalar_select %p173, %s18, 0
      %s175 = smul.addr %s172, 4
      %s176 = sadd.s32 %s174, %s175
      %s177 = smul.addr %s176, 4
      %s178 = scalar_lea.vmem %s0, %s177
      %p179 = scmp.lt.s32.totalorder %s17, 2
      %s180 = scalar_select %p179, %s17, 2
      %s181 = smul.addr %s180, 4
      %s182 = scalar_lea.vmem %s1, %s181
      %p183 = scmp.lt.s32.totalorder %s17, 2
      %s184 = scalar_select %p183, %s17, 2
      %p185 = scmp.lt.s32.totalorder %s18, 0
      %s186 = scalar_select %p185, %s18, 0
      %s187 = sadd.s32 %s186, %s184
      %s188 = smul.addr %s187, 4
      %s189 = scalar_lea.vmem %s2, %s188
      %v190 = vld [vmem:[%s182] sm:$0xf]
      %v191 = vld [vmem:[%s178] sm:$0xf]
      %v192 = vperm.slane %v190, 0
      %v193 = vmul.f32 %v191, %v192
      %s194 = scalar_lea.vmem %s178, 4
      %v195 = vld [vmem:[%s194] sm:$0xf]
      %v196 = vperm.slane %v190, 1
      %v197 = vmul.f32 %v195, %v196
      %v198 = vadd.f32 %v193, %v197
      %s199 = scalar_lea.vmem %s178, 8
      %v200 = vld [vmem:[%s199] sm:$0xf]
      %v201 = vperm.slane %v190, 2
      %v202 = vmul.f32 %v200, %v201
      %v203 = vadd.f32 %v198, %v202
      %s204 = scalar_lea.vmem %s178, 12
      %v205 = vld [vmem:[%s204] sm:$0xf]
      %v206 = vperm.slane %v190, 3
      %v207 = vmul.f32 %v205, %v206
      %v208 = vadd.f32 %v203, %v207
      %209 = vst [vmem:[%s189] sm:$0xf] %v208
      %p210 = scmp.lt.s32.totalorder %s17, 2
      %s211 = scalar_select %p210, %s17, 2
      %p212 = scmp.lt.s32.totalorder %s18, 0
      %s213 = scalar_select %p212, %s18, 0
      %s214 = sadd.s32 %s213, %s211
      %s215 = smul.addr %s214, 4
      %s216 = scalar_lea.vmem %s2, %s215
      // Predicated region
      $region29: #{onedim_convolution.1} parent=27 // pred_check
        %p217 = pneg %p99
      $region30: #{onedim_convolution.1} parent=27 // pred_check_branch
        %219 = sbr.rel (%p217) target = $region32
      $region31: #{onedim_convolution.1} parent=27 // pred_region
        _
      $region32: #{onedim_convolution.1} parent=27 // pred_fallthru
        _
    $region28: #{onedim_convolution.1} parent=5 // pred_fallthru
      _
    %p220 = scmp.le.s32.totalorder 2, %s8
    // Predicated region
    $region33: #{onedim_convolution.1} parent=5 // pred_check
      %p221 = pneg %p220
    $region34: #{onedim_convolution.1} parent=5 // pred_check_branch
      %223 = sbr.rel (%p221) target = $region36
    $region35: #{onedim_convolution.1} parent=5 // pred_region
      %s224 = ssub.s32 %s8, 2
      // Predicated region
      $region37: #{onedim_convolution.1} parent=35 // pred_check
        %p225 = pneg %p105
      $region38: #{onedim_convolution.1} parent=35 // pred_check_branch
        %227 = sbr.rel (%p225) target = $region40
      $region39: #{onedim_convolution.1} parent=35 // pred_region
        %p228 = scmp.lt.s32.totalorder %s19, 2
        %s229 = scalar_select %p228, %s19, 2
        %p230 = scmp.lt.s32.totalorder %s20, 0
        %s231 = scalar_select %p230, %s20, 0
        %s232 = sadd.s32 %s231, %s229
        %s233 = smul.addr %s232, 4
        %s234 = scalar_lea.vmem %s2, %s233
      $region40: #{onedim_convolution.1} parent=35 // pred_fallthru
        _
    $region36: #{onedim_convolution.1} parent=5 // pred_fallthru
      _
  $region6: #{onedim_convolution.1} parent=0 // loop_footer
    %s12 = sadd.s32 1, %s8
  $region7: #{onedim_convolution.1} parent=0 // loop_footer_branch
    %7 = sbr.rel target = $region3
  $region8: #{onedim_convolution.1} parent=0 // loop_exit
    _

</llo_original>
